<compile_context>
chip_gen: v6e
topology: v6e:2x2x1
jax: 0.10.0
libtpu: 0.0.40
codegen_flags: <defaults>
</compile_context>

<pallas_src>
import functools

import jax
import jax.numpy as jnp
from jax.experimental import pallas as pl
from jax.experimental.pallas import tpu as pltpu


def small_basic_block_kernel(x_ref, w1_ref, b1_ref, w2_ref, b2_ref,
                             w3_ref, b3_ref, w4_ref, b4_ref, o_ref,
                             *, H, W):
    # x_ref: (Cin, H*W) -- batch dim squeezed away by the BlockSpec.
    _, HW = x_ref.shape
    C4 = w1_ref.shape[0]

    x = x_ref[...]

    # ---- conv1: 1x1 conv == (C4, Cin) @ (Cin, HW), + bias, ReLU ------------
    y = jnp.dot(w1_ref[...], x, preferred_element_type=jnp.float32)
    y = jnp.maximum(y + b1_ref[...], 0.0)                       # (C4, HW)

    # Lane-index helpers for boundary masks (shared by conv2 / conv3).
    lane = jax.lax.broadcasted_iota(jnp.int32, (C4, HW), 1)
    w_idx = lane % W

    # ---- conv2: kernel (3,1), padding (1,0) along H ------------------------
    # Shift along H == shift by +-W on the flattened lane axis: pltpu.roll
    # (circular, same convention as jnp.roll) + zero-mask at the boundary.
    tap_hm = jnp.where(lane >= W, pltpu.roll(y, W, axis=1), 0.0)            # h-1
    tap_hp = jnp.where(lane < HW - W, pltpu.roll(y, HW - W, axis=1), 0.0)   # h+1
    taps = jnp.concatenate([tap_hm, y, tap_hp], axis=0)          # (3*C4, HW)
    y = jnp.dot(w2_ref[...], taps, preferred_element_type=jnp.float32)
    y = jnp.maximum(y + b2_ref[...], 0.0)

    # ---- conv3: kernel (1,3), padding (0,1) along W ------------------------
    tap_wm = jnp.where(w_idx >= 1, pltpu.roll(y, 1, axis=1), 0.0)           # w-1
    tap_wp = jnp.where(w_idx <= W - 2, pltpu.roll(y, HW - 1, axis=1), 0.0)  # w+1
    taps = jnp.concatenate([tap_wm, y, tap_wp], axis=0)          # (3*C4, HW)
    y = jnp.dot(w3_ref[...], taps, preferred_element_type=jnp.float32)
    y = jnp.maximum(y + b3_ref[...], 0.0)

    # ---- conv4: 1x1 conv, no activation -------------------------------------
    o_ref[...] = (jnp.dot(w4_ref[...], y, preferred_element_type=jnp.float32)
                  + b4_ref[...])


def small_basic_block_pallas(x_nchw, kparams):
    """x_nchw: (B, Cin, H, W) float32; kparams: kernel-layout weights/biases."""
    w1, b1, w2, b2, w3, b3, w4, b4 = kparams
    B, Cin, H, W = x_nchw.shape
    C4 = w1.shape[0]
    Cout = w4.shape[0]
    HW = H * W

    # Contiguous reshape only (free) -- channels already lead in NCHW.
    x = x_nchw.reshape(B, Cin, HW)

    def wspec(a):
        return pl.BlockSpec(a.shape, lambda b, n=a.ndim: (0,) * n)

    kernel = functools.partial(small_basic_block_kernel, H=H, W=W)

    flops = 2 * B * HW * (Cin * C4 + 2 * (3 * C4) * C4 + C4 * Cout)
    bytes_accessed = 4 * (x.size + B * Cout * HW
                          + sum(int(a.size) for a in kparams))

    # grid=(B,) marked "parallel": with B>=2 both v7x TensorCores get work.
    # At these sizes everything fits comfortably in VMEM on v5e/v6e/v7x, so
    # the default scoped-VMEM limit is left untouched.
    out = pl.pallas_call(
        kernel,
        out_shape=jax.ShapeDtypeStruct((B, Cout, HW), jnp.float32),
        grid=(B,),
        in_specs=[pl.BlockSpec((pl.Squeezed(), Cin, HW), lambda b: (b, 0, 0)),
                  wspec(w1), wspec(b1), wspec(w2), wspec(b2),
                  wspec(w3), wspec(b3), wspec(w4), wspec(b4)],
        out_specs=pl.BlockSpec((pl.Squeezed(), Cout, HW), lambda b: (b, 0, 0)),
        compiler_params=pltpu.CompilerParams(
            dimension_semantics=("parallel",)),
        cost_estimate=pl.CostEstimate(flops=int(flops), transcendentals=0,
                                      bytes_accessed=int(bytes_accessed)),
    )(x, w1, b1, w2, b2, w3, b3, w4, b4)

    return out.reshape(B, Cout, H, W)


# ---------------- parameter setup (deterministic, PyTorch shapes) ------------
def init_params(key, ch_in, ch_out):
    """Returns (pt_params, kernel_params).

    pt_params use PyTorch OIHW conv weight layout (for the plain-JAX reference).
    kernel_params are reshaped for the Pallas kernel (channels-on-M matmuls):
      1x1 convs        -> (Cout, Cin)
      (3,1)/(1,3) convs -> (Cout, 3*Cin), element [o, k*Cin + i] = w[o, i, tap k]
      biases           -> (C, 1) column vectors (broadcast along lanes)
    """
    c4 = ch_out // 4
    ks = jax.random.split(key, 8)

    def u(k, shape, fan_in):
        bound = 1.0 / jnp.sqrt(fan_in)
        return jax.random.uniform(k, shape, jnp.float32, -bound, bound)

    # PyTorch Conv2d default init: U(-1/sqrt(fan_in), 1/sqrt(fan_in))
    w1 = u(ks[0], (c4, ch_in, 1, 1), ch_in * 1 * 1)
    b1 = u(ks[1], (c4,), ch_in * 1 * 1)
    w2 = u(ks[2], (c4, c4, 3, 1), c4 * 3 * 1)
    b2 = u(ks[3], (c4,), c4 * 3 * 1)
    w3 = u(ks[4], (c4, c4, 1, 3), c4 * 1 * 3)
    b3 = u(ks[5], (c4,), c4 * 1 * 3)
    w4 = u(ks[6], (ch_out, c4, 1, 1), c4 * 1 * 1)
    b4 = u(ks[7], (ch_out,), c4 * 1 * 1)

    pt_params = (w1, b1, w2, b2, w3, b3, w4, b4)

    kw1 = w1[:, :, 0, 0]                                               # (C4, Cin)
    kw2 = jnp.transpose(w2[:, :, :, 0], (0, 2, 1)).reshape(c4, 3 * c4)  # [o,kh*C4+i]
    kw3 = jnp.transpose(w3[:, :, 0, :], (0, 2, 1)).reshape(c4, 3 * c4)  # [o,kw*C4+i]
    kw4 = w4[:, :, 0, 0]                                               # (Cout, C4)
    kparams = (kw1, b1[:, None], kw2, b2[:, None],
               kw3, b3[:, None], kw4, b4[:, None])
    return pt_params, kparams


# ---------------- plain-JAX reference (mirrors PyTorch semantics) ------------
def ref_forward(x, pt_params):
    w1, b1, w2, b2, w3, b3, w4, b4 = pt_params

    def conv(x, w, b, pad):
        y = jax.lax.conv_general_dilated(
            x, w, window_strides=(1, 1), padding=pad,
            dimension_numbers=('NCHW', 'OIHW', 'NCHW'))
        return y + b[None, :, None, None]

    y = jax.nn.relu(conv(x, w1, b1, [(0, 0), (0, 0)]))
    y = jax.nn.relu(conv(y, w2, b2, [(1, 1), (0, 0)]))
    y = jax.nn.relu(conv(y, w3, b3, [(0, 0), (1, 1)]))
    return conv(y, w4, b4, [(0, 0), (0, 0)])


if __name__ == "__main__":
    B, CH_IN, CH_OUT, H, W = 2, 4, 32, 16, 16

    key = jax.random.PRNGKey(0)
    kx, kp = jax.random.split(key)
    x = jax.random.normal(kx, (B, CH_IN, H, W), jnp.float32)

    pt_params, kparams = init_params(kp, CH_IN, CH_OUT)

    out = small_basic_block_pallas(x, kparams)
    out = jax.block_until_ready(out)

    ref = jax.block_until_ready(ref_forward(x, pt_params))
    assert out.shape == (B, CH_OUT, H, W), out.shape
    assert jnp.allclose(out, ref, atol=1e-5, rtol=1e-5), \
        float(jnp.max(jnp.abs(out - ref)))

    print("KERNEL_OK")
</pallas_src>

<mosaic_0001>
module attributes {stable_mosaic.version = 11 : i64} {
  func.func @small_basic_block_kernel(%arg0: i32, %arg1: memref<1x4x256xf32, #tpu.memory_space<vmem>>, %arg2: memref<8x4xf32, #tpu.memory_space<vmem>>, %arg3: memref<8x1xf32, #tpu.memory_space<vmem>>, %arg4: memref<8x24xf32, #tpu.memory_space<vmem>>, %arg5: memref<8x1xf32, #tpu.memory_space<vmem>>, %arg6: memref<8x24xf32, #tpu.memory_space<vmem>>, %arg7: memref<8x1xf32, #tpu.memory_space<vmem>>, %arg8: memref<32x8xf32, #tpu.memory_space<vmem>>, %arg9: memref<32x1xf32, #tpu.memory_space<vmem>>, %arg10: memref<1x32x256xf32, #tpu.memory_space<vmem>>) attributes {dimension_semantics = [#tpu.dimension_semantics<parallel>], iteration_bounds = array<i64: 2>, scalar_prefetch = 0 : i64, scratch_operands = 0 : i64, tpu.core_type = #tpu.core_type<tc>, window_params = [{transform_indices = @transform_0, window_bounds = array<i64: 1, 4, 256>}, {pipeline_mode = #tpu.pipeline_mode<synchronous>, transform_indices = @transform_1, window_bounds = array<i64: 8, 4>}, {pipeline_mode = #tpu.pipeline_mode<synchronous>, transform_indices = @transform_2, window_bounds = array<i64: 8, 1>}, {pipeline_mode = #tpu.pipeline_mode<synchronous>, transform_indices = @transform_3, window_bounds = array<i64: 8, 24>}, {pipeline_mode = #tpu.pipeline_mode<synchronous>, transform_indices = @transform_4, window_bounds = array<i64: 8, 1>}, {pipeline_mode = #tpu.pipeline_mode<synchronous>, transform_indices = @transform_5, window_bounds = array<i64: 8, 24>}, {pipeline_mode = #tpu.pipeline_mode<synchronous>, transform_indices = @transform_6, window_bounds = array<i64: 8, 1>}, {pipeline_mode = #tpu.pipeline_mode<synchronous>, transform_indices = @transform_7, window_bounds = array<i64: 32, 8>}, {pipeline_mode = #tpu.pipeline_mode<synchronous>, transform_indices = @transform_8, window_bounds = array<i64: 32, 1>}, {transform_indices = @transform_9, window_bounds = array<i64: 1, 32, 256>}]} {
    %c0 = arith.constant 0 : index
    %c0_0 = arith.constant 0 : index
    %c0_1 = arith.constant 0 : index
    %0 = vector.load %arg1[%c0, %c0_0, %c0_1] : memref<1x4x256xf32, #tpu.memory_space<vmem>>, vector<1x4x256xf32>
    %1 = vector.shape_cast %0 : vector<1x4x256xf32> to vector<4x256xf32>
    %c0_2 = arith.constant 0 : index
    %c0_3 = arith.constant 0 : index
    %2 = vector.load %arg2[%c0_2, %c0_3] : memref<8x4xf32, #tpu.memory_space<vmem>>, vector<8x4xf32>
    %cst = arith.constant dense<0.000000e+00> : vector<8x256xf32>
    %3 = tpu.matmul %2, %1, %cst {dimension_numbers = #tpu.dot_dimension_numbers<[1], [0], [0], [1], [0, 0, 1, 1], [], []>} : vector<8x4xf32>, vector<4x256xf32>, vector<8x256xf32> -> vector<8x256xf32>
    %c0_4 = arith.constant 0 : index
    %c0_5 = arith.constant 0 : index
    %4 = vector.load %arg3[%c0_4, %c0_5] : memref<8x1xf32, #tpu.memory_space<vmem>>, vector<8x1xf32>
    %5 = vector.broadcast %4 : vector<8x1xf32> to vector<8x256xf32>
    %6 = arith.addf %3, %5 : vector<8x256xf32>
    %cst_6 = arith.constant 0.000000e+00 : f32
    %7 = vector.broadcast %cst_6 : f32 to vector<8x256xf32>
    %8 = arith.maximumf %6, %7 : vector<8x256xf32>
    %9 = tpu.iota {dimensions = array<i32: 1>} : vector<8x256xi32>
    %c16_i32 = arith.constant 16 : i32
    %c0_i32 = arith.constant 0 : i32
    %10 = arith.cmpi eq, %c16_i32, %c0_i32 : i32
    %c1_i32 = arith.constant 1 : i32
    %11 = arith.select %10, %c1_i32, %c16_i32 : i32
    %12 = vector.broadcast %11 : i32 to vector<8x256xi32>
    %13 = arith.remsi %9, %12 : vector<8x256xi32>
    %c0_i32_7 = arith.constant 0 : i32
    %14 = vector.broadcast %c0_i32_7 : i32 to vector<8x256xi32>
    %15 = arith.cmpi ne, %13, %14 : vector<8x256xi32>
    %c0_i32_8 = arith.constant 0 : i32
    %16 = vector.broadcast %c0_i32_8 : i32 to vector<8x256xi32>
    %17 = arith.cmpi slt, %13, %16 : vector<8x256xi32>
    %c0_i32_9 = arith.constant 0 : i32
    %18 = arith.cmpi slt, %11, %c0_i32_9 : i32
    %19 = vector.broadcast %18 : i1 to vector<8x256xi1>
    %20 = vector.broadcast %19 : vector<8x256xi1> to vector<8x256xi1>
    %21 = arith.xori %17, %20 : vector<8x256xi1>
    %22 = arith.andi %21, %15 : vector<8x256xi1>
    %23 = vector.broadcast %11 : i32 to vector<8x256xi32>
    %24 = arith.addi %13, %23 : vector<8x256xi32>
    %25 = arith.select %22, %24, %13 : vector<8x256xi1>, vector<8x256xi32>
    %c16_i32_10 = arith.constant 16 : i32
    %26 = vector.broadcast %c16_i32_10 : i32 to vector<8x256xi32>
    %27 = arith.cmpi sge, %9, %26 : vector<8x256xi32>
    %c16_i32_11 = arith.constant 16 : i32
    %28 = tpu.dynamic_rotate %8 by %c16_i32_11 dim 1 : vector<8x256xf32>, i32 -> vector<8x256xf32>
    %cst_12 = arith.constant 0.000000e+00 : f32
    %29 = vector.broadcast %cst_12 : f32 to vector<8x256xf32>
    %30 = arith.select %27, %28, %29 : vector<8x256xi1>, vector<8x256xf32>
    %c240_i32 = arith.constant 240 : i32
    %31 = vector.broadcast %c240_i32 : i32 to vector<8x256xi32>
    %32 = arith.cmpi slt, %9, %31 : vector<8x256xi32>
    %c240_i32_13 = arith.constant 240 : i32
    %33 = tpu.dynamic_rotate %8 by %c240_i32_13 dim 1 : vector<8x256xf32>, i32 -> vector<8x256xf32>
    %cst_14 = arith.constant 0.000000e+00 : f32
    %34 = vector.broadcast %cst_14 : f32 to vector<8x256xf32>
    %35 = arith.select %32, %33, %34 : vector<8x256xi1>, vector<8x256xf32>
    %36 = tpu.concatenate %30, %8, %35 in 0 : vector<8x256xf32>, vector<8x256xf32>, vector<8x256xf32> -> vector<24x256xf32>
    %c0_15 = arith.constant 0 : index
    %c0_16 = arith.constant 0 : index
    %37 = vector.load %arg4[%c0_15, %c0_16] : memref<8x24xf32, #tpu.memory_space<vmem>>, vector<8x24xf32>
    %cst_17 = arith.constant dense<0.000000e+00> : vector<8x256xf32>
    %38 = tpu.matmul %37, %36, %cst_17 {dimension_numbers = #tpu.dot_dimension_numbers<[1], [0], [0], [1], [0, 0, 1, 1], [], []>} : vector<8x24xf32>, vector<24x256xf32>, vector<8x256xf32> -> vector<8x256xf32>
    %c0_18 = arith.constant 0 : index
    %c0_19 = arith.constant 0 : index
    %39 = vector.load %arg5[%c0_18, %c0_19] : memref<8x1xf32, #tpu.memory_space<vmem>>, vector<8x1xf32>
    %40 = vector.broadcast %39 : vector<8x1xf32> to vector<8x256xf32>
    %41 = arith.addf %38, %40 : vector<8x256xf32>
    %cst_20 = arith.constant 0.000000e+00 : f32
    %42 = vector.broadcast %cst_20 : f32 to vector<8x256xf32>
    %43 = arith.maximumf %41, %42 : vector<8x256xf32>
    %c1_i32_21 = arith.constant 1 : i32
    %44 = vector.broadcast %c1_i32_21 : i32 to vector<8x256xi32>
    %45 = arith.cmpi sge, %25, %44 : vector<8x256xi32>
    %c1_i32_22 = arith.constant 1 : i32
    %46 = tpu.dynamic_rotate %43 by %c1_i32_22 dim 1 : vector<8x256xf32>, i32 -> vector<8x256xf32>
    %cst_23 = arith.constant 0.000000e+00 : f32
    %47 = vector.broadcast %cst_23 : f32 to vector<8x256xf32>
    %48 = arith.select %45, %46, %47 : vector<8x256xi1>, vector<8x256xf32>
    %c14_i32 = arith.constant 14 : i32
    %49 = vector.broadcast %c14_i32 : i32 to vector<8x256xi32>
    %50 = arith.cmpi sle, %25, %49 : vector<8x256xi32>
    %c255_i32 = arith.constant 255 : i32
    %51 = tpu.dynamic_rotate %43 by %c255_i32 dim 1 : vector<8x256xf32>, i32 -> vector<8x256xf32>
    %cst_24 = arith.constant 0.000000e+00 : f32
    %52 = vector.broadcast %cst_24 : f32 to vector<8x256xf32>
    %53 = arith.select %50, %51, %52 : vector<8x256xi1>, vector<8x256xf32>
    %54 = tpu.concatenate %48, %43, %53 in 0 : vector<8x256xf32>, vector<8x256xf32>, vector<8x256xf32> -> vector<24x256xf32>
    %c0_25 = arith.constant 0 : index
    %c0_26 = arith.constant 0 : index
    %55 = vector.load %arg6[%c0_25, %c0_26] : memref<8x24xf32, #tpu.memory_space<vmem>>, vector<8x24xf32>
    %cst_27 = arith.constant dense<0.000000e+00> : vector<8x256xf32>
    %56 = tpu.matmul %55, %54, %cst_27 {dimension_numbers = #tpu.dot_dimension_numbers<[1], [0], [0], [1], [0, 0, 1, 1], [], []>} : vector<8x24xf32>, vector<24x256xf32>, vector<8x256xf32> -> vector<8x256xf32>
    %c0_28 = arith.constant 0 : index
    %c0_29 = arith.constant 0 : index
    %57 = vector.load %arg7[%c0_28, %c0_29] : memref<8x1xf32, #tpu.memory_space<vmem>>, vector<8x1xf32>
    %58 = vector.broadcast %57 : vector<8x1xf32> to vector<8x256xf32>
    %59 = arith.addf %56, %58 : vector<8x256xf32>
    %cst_30 = arith.constant 0.000000e+00 : f32
    %60 = vector.broadcast %cst_30 : f32 to vector<8x256xf32>
    %61 = arith.maximumf %59, %60 : vector<8x256xf32>
    %c0_31 = arith.constant 0 : index
    %c0_32 = arith.constant 0 : index
    %62 = vector.load %arg8[%c0_31, %c0_32] : memref<32x8xf32, #tpu.memory_space<vmem>>, vector<32x8xf32>
    %cst_33 = arith.constant dense<0.000000e+00> : vector<32x256xf32>
    %63 = tpu.matmul %62, %61, %cst_33 {dimension_numbers = #tpu.dot_dimension_numbers<[1], [0], [0], [1], [0, 0, 1, 1], [], []>} : vector<32x8xf32>, vector<8x256xf32>, vector<32x256xf32> -> vector<32x256xf32>
    %c0_34 = arith.constant 0 : index
    %c0_35 = arith.constant 0 : index
    %64 = vector.load %arg9[%c0_34, %c0_35] : memref<32x1xf32, #tpu.memory_space<vmem>>, vector<32x1xf32>
    %65 = vector.broadcast %64 : vector<32x1xf32> to vector<32x256xf32>
    %66 = arith.addf %63, %65 : vector<32x256xf32>
    %c0_36 = arith.constant 0 : index
    %c0_37 = arith.constant 0 : index
    %c0_38 = arith.constant 0 : index
    %67 = vector.load %arg10[%c0_36, %c0_37, %c0_38] : memref<1x32x256xf32, #tpu.memory_space<vmem>>, vector<1x32x256xf32>
    %68 = vector.shape_cast %67 : vector<1x32x256xf32> to vector<32x256xf32>
    %69 = vector.shape_cast %66 : vector<32x256xf32> to vector<1x32x256xf32>
    tpu.vector_store %arg10[%c0_36, %c0_37, %c0_38], %69 {strides = array<i32>} : memref<1x32x256xf32, #tpu.memory_space<vmem>>, vector<1x32x256xf32>,
    return
  }
  func.func @transform_0(%arg0: i32) -> (i32, i32, i32) {
    %c0_i32 = arith.constant 0 : i32
    %c0_i32_0 = arith.constant 0 : i32
    %c0_i32_1 = arith.constant 0 : i32
    return %arg0, %c0_i32, %c0_i32_0 : i32, i32, i32
  }
  func.func @transform_1(%arg0: i32) -> (i32, i32) {
    %c0_i32 = arith.constant 0 : i32
    %c0_i32_0 = arith.constant 0 : i32
    %c0_i32_1 = arith.constant 0 : i32
    return %c0_i32, %c0_i32_0 : i32, i32
  }
  func.func @transform_2(%arg0: i32) -> (i32, i32) {
    %c0_i32 = arith.constant 0 : i32
    %c0_i32_0 = arith.constant 0 : i32
    %c0_i32_1 = arith.constant 0 : i32
    return %c0_i32, %c0_i32_0 : i32, i32
  }
  func.func @transform_3(%arg0: i32) -> (i32, i32) {
    %c0_i32 = arith.constant 0 : i32
    %c0_i32_0 = arith.constant 0 : i32
    %c0_i32_1 = arith.constant 0 : i32
    return %c0_i32, %c0_i32_0 : i32, i32
  }
  func.func @transform_4(%arg0: i32) -> (i32, i32) {
    %c0_i32 = arith.constant 0 : i32
    %c0_i32_0 = arith.constant 0 : i32
    %c0_i32_1 = arith.constant 0 : i32
    return %c0_i32, %c0_i32_0 : i32, i32
  }
  func.func @transform_5(%arg0: i32) -> (i32, i32) {
    %c0_i32 = arith.constant 0 : i32
    %c0_i32_0 = arith.constant 0 : i32
    %c0_i32_1 = arith.constant 0 : i32
    return %c0_i32, %c0_i32_0 : i32, i32
  }
  func.func @transform_6(%arg0: i32) -> (i32, i32) {
    %c0_i32 = arith.constant 0 : i32
    %c0_i32_0 = arith.constant 0 : i32
    %c0_i32_1 = arith.constant 0 : i32
    return %c0_i32, %c0_i32_0 : i32, i32
  }
  func.func @transform_7(%arg0: i32) -> (i32, i32) {
    %c0_i32 = arith.constant 0 : i32
    %c0_i32_0 = arith.constant 0 : i32
    %c0_i32_1 = arith.constant 0 : i32
    return %c0_i32, %c0_i32_0 : i32, i32
  }
  func.func @transform_8(%arg0: i32) -> (i32, i32) {
    %c0_i32 = arith.constant 0 : i32
    %c0_i32_0 = arith.constant 0 : i32
    %c0_i32_1 = arith.constant 0 : i32
    return %c0_i32, %c0_i32_0 : i32, i32
  }
  func.func @transform_9(%arg0: i32) -> (i32, i32, i32) {
    %c0_i32 = arith.constant 0 : i32
    %c0_i32_0 = arith.constant 0 : i32
    %c0_i32_1 = arith.constant 0 : i32
    return %arg0, %c0_i32, %c0_i32_0 : i32, i32, i32
  }
}

</mosaic_0001>

<llo_original>
// kernel: tpu_custom_call.1
$region0: #{tpu_custom_call.1}
  #allocation0 [shape = 'u32[]', space=smem, size = 0x4, offset = 0x4, fixed_abs, tag = 'smem constant byte address 0x4 - core index']
  #allocation1 [shape = 'u32[144,128]{1,0:T(1,128)}', space=vmem, size = 0x12000, scoped, tag = 'internal scratch']
  %s0 = inlined_call_operand.vmem [shape: f32[2,4,256], index: 0, kind: input, shape index: {}]
  %s1 = inlined_call_operand.vmem [shape: f32[8,4], index: 1, kind: input, shape index: {}]
  %s2 = inlined_call_operand.vmem [shape: f32[8,1], index: 2, kind: input, shape index: {}]
  %s3 = inlined_call_operand.vmem [shape: f32[8,24], index: 3, kind: input, shape index: {}]
  %s4 = inlined_call_operand.vmem [shape: f32[8,1], index: 4, kind: input, shape index: {}]
  %s5 = inlined_call_operand.vmem [shape: f32[8,24], index: 5, kind: input, shape index: {}]
  %s6 = inlined_call_operand.vmem [shape: f32[8,1], index: 6, kind: input, shape index: {}]
  %s7 = inlined_call_operand.vmem [shape: f32[32,8], index: 7, kind: input, shape index: {}]
  %s8 = inlined_call_operand.vmem [shape: f32[32,1], index: 8, kind: input, shape index: {}]
  %s9 = inlined_call_operand.hbm [shape: f32[2,32,256], index: 9, kind: output, shape index: {}]
  %s10 = sld [smem:[#allocation0]]
  $region69: #{tpu_custom_call.1} parent=0
    _
  %s12 = ssub.s32 1, %s10
  %s13 = scalar_select 0, %s12, %s10
  $region1: #{tpu_custom_call.1} parent=0
    #allocation2 [shape = 'u8[65536]{0}', space=vmem, size = 0x10000, scoped, tag = 'output window, operand 0']
    #allocation3 [shape = 's32[2]{0}', space=sflag, size = 0x8, scoped, tag = 'scoped memory for tpu_custom_call.1']
    %14 = vsyncpa [#allocation3], 0
    %s15 = scalar_lea.sflag [#allocation3], 1
    %16 = vsyncpa %s15, 0
    loop: start=0, step=1, limit=4
    $region2: #{tpu_custom_call.1} parent=1 // loop_pre_header
      _
    $region3: #{tpu_custom_call.1} parent=1 // loop_header
      %s18 = sphi 0, %s22
      %p19 = scmp.ge.s32.totalorder %s18, 4
      %s28 = sphi 0, %s30
      %s31 = sphi 0, %s28
      %s32 = sphi 0, %s31
      %s48 = sphi 0, %s32
      %s52 = sphi 0, %s52
      %s54 = sphi 0, %s52
      %s55 = sphi 0, %s54
      %s69 = sphi 0, %s55
      %s73 = sphi 0, %s73
      %s75 = sphi 0, %s73
      %s76 = sphi 0, %s75
      %s90 = sphi 0, %s76
      %s94 = sphi 0, %s94
      %s96 = sphi 0, %s94
      %s97 = sphi 0, %s96
      %s111 = sphi 0, %s97
      %s115 = sphi 0, %s115
      %s117 = sphi 0, %s115
      %s118 = sphi 0, %s117
      %s132 = sphi 0, %s118
      %s136 = sphi 0, %s136
      %s138 = sphi 0, %s136
      %s139 = sphi 0, %s138
      %s153 = sphi 0, %s139
      %s157 = sphi 0, %s157
      %s159 = sphi 0, %s157
      %s160 = sphi 0, %s159
      %s174 = sphi 0, %s160
      %s178 = sphi 0, %s178
      %s180 = sphi 0, %s178
      %s181 = sphi 0, %s180
      %s195 = sphi 0, %s181
      %s199 = sphi 0, %s199
      %s201 = sphi 0, %s199
      %s202 = sphi 0, %s201
      %s216 = sphi 0, %s202
      %s222 = sphi 0, %s224
      %s225 = sphi 0, %s222
      %s226 = sphi 0, %s225
      %s242 = sphi 0, %s226
    $region4: #{tpu_custom_call.1} parent=1 // loop_header_branch
      %21 = sbr.rel (%p19) target = $region8
    $region5: #{tpu_custom_call.1} parent=1 // loop_body
      %s23 = ssub.s32 %s18, 1
      %s24 = ssub.s32 %s18, 2
      %s25 = sadd.s32 %s18, 1
      %s26 = ssub.s32 %s18, %s25
      %p27 = scmp.eq.s32.totalorder %s26, 0
      %s29 = sadd.s32 %s28, 1
      %s30 = scalar_select %p27, %s28, %s29
      %p33 = pneg %p27
      %p34 = scmp.eq.s32.totalorder %s18, 1
      %p35 = por %p33, %p34
      %p36 = scmp.ne.s32.totalorder %s28, %s31
      %p37 = scmp.eq.s32.totalorder %s18, 0
      %p38 = por %p36, %p37
      %p39 = scmp.ne.s32.totalorder %s28, %s31
      %p40 = scmp.eq.s32.totalorder %s23, 1
      %p41 = por %p39, %p40
      %p42 = scmp.ne.s32.totalorder %s31, %s32
      %p43 = scmp.eq.s32.totalorder %s23, 0
      %p44 = por %p42, %p43
      %p45 = scmp.ne.s32.totalorder %s31, %s32
      %p46 = scmp.eq.s32.totalorder %s24, 1
      %p47 = por %p45, %p46
      %p49 = scmp.ne.s32.totalorder %s32, %s48
      %p50 = scmp.eq.s32.totalorder %s24, 0
      %p51 = por %p49, %p50
      %s53 = sadd.s32 %s52, 1
      %p56 = scmp.eq.s32.totalorder %s18, 1
      %p57 = scmp.ne.s32.totalorder %s52, %s54
      %p58 = scmp.eq.s32.totalorder %s18, 0
      %p59 = por %p57, %p58
      %p60 = scmp.ne.s32.totalorder %s52, %s54
      %p61 = scmp.eq.s32.totalorder %s23, 1
      %p62 = por %p60, %p61
      %p63 = scmp.ne.s32.totalorder %s54, %s55
      %p64 = scmp.eq.s32.totalorder %s23, 0
      %p65 = por %p63, %p64
      %p66 = scmp.ne.s32.totalorder %s54, %s55
      %p67 = scmp.eq.s32.totalorder %s24, 1
      %p68 = por %p66, %p67
      %p70 = scmp.ne.s32.totalorder %s55, %s69
      %p71 = scmp.eq.s32.totalorder %s24, 0
      %p72 = por %p70, %p71
      %s74 = sadd.s32 %s73, 1
      %p77 = scmp.eq.s32.totalorder %s18, 1
      %p78 = scmp.ne.s32.totalorder %s73, %s75
      %p79 = scmp.eq.s32.totalorder %s18, 0
      %p80 = por %p78, %p79
      %p81 = scmp.ne.s32.totalorder %s73, %s75
      %p82 = scmp.eq.s32.totalorder %s23, 1
      %p83 = por %p81, %p82
      %p84 = scmp.ne.s32.totalorder %s75, %s76
      %p85 = scmp.eq.s32.totalorder %s23, 0
      %p86 = por %p84, %p85
      %p87 = scmp.ne.s32.totalorder %s75, %s76
      %p88 = scmp.eq.s32.totalorder %s24, 1
      %p89 = por %p87, %p88
      %p91 = scmp.ne.s32.totalorder %s76, %s90
      %p92 = scmp.eq.s32.totalorder %s24, 0
      %p93 = por %p91, %p92
      %s95 = sadd.s32 %s94, 1
      %p98 = scmp.eq.s32.totalorder %s18, 1
      %p99 = scmp.ne.s32.totalorder %s94, %s96
      %p100 = scmp.eq.s32.totalorder %s18, 0
      %p101 = por %p99, %p100
      %p102 = scmp.ne.s32.totalorder %s94, %s96
      %p103 = scmp.eq.s32.totalorder %s23, 1
      %p104 = por %p102, %p103
      %p105 = scmp.ne.s32.totalorder %s96, %s97
      %p106 = scmp.eq.s32.totalorder %s23, 0
      %p107 = por %p105, %p106
      %p108 = scmp.ne.s32.totalorder %s96, %s97
      %p109 = scmp.eq.s32.totalorder %s24, 1
      %p110 = por %p108, %p109
      %p112 = scmp.ne.s32.totalorder %s97, %s111
      %p113 = scmp.eq.s32.totalorder %s24, 0
      %p114 = por %p112, %p113
      %s116 = sadd.s32 %s115, 1
      %p119 = scmp.eq.s32.totalorder %s18, 1
      %p120 = scmp.ne.s32.totalorder %s115, %s117
      %p121 = scmp.eq.s32.totalorder %s18, 0
      %p122 = por %p120, %p121
      %p123 = scmp.ne.s32.totalorder %s115, %s117
      %p124 = scmp.eq.s32.totalorder %s23, 1
      %p125 = por %p123, %p124
      %p126 = scmp.ne.s32.totalorder %s117, %s118
      %p127 = scmp.eq.s32.totalorder %s23, 0
      %p128 = por %p126, %p127
      %p129 = scmp.ne.s32.totalorder %s117, %s118
      %p130 = scmp.eq.s32.totalorder %s24, 1
      %p131 = por %p129, %p130
      %p133 = scmp.ne.s32.totalorder %s118, %s132
      %p134 = scmp.eq.s32.totalorder %s24, 0
      %p135 = por %p133, %p134
      %s137 = sadd.s32 %s136, 1
      %p140 = scmp.eq.s32.totalorder %s18, 1
      %p141 = scmp.ne.s32.totalorder %s136, %s138
      %p142 = scmp.eq.s32.totalorder %s18, 0
      %p143 = por %p141, %p142
      %p144 = scmp.ne.s32.totalorder %s136, %s138
      %p145 = scmp.eq.s32.totalorder %s23, 1
      %p146 = por %p144, %p145
      %p147 = scmp.ne.s32.totalorder %s138, %s139
      %p148 = scmp.eq.s32.totalorder %s23, 0
      %p149 = por %p147, %p148
      %p150 = scmp.ne.s32.totalorder %s138, %s139
      %p151 = scmp.eq.s32.totalorder %s24, 1
      %p152 = por %p150, %p151
      %p154 = scmp.ne.s32.totalorder %s139, %s153
      %p155 = scmp.eq.s32.totalorder %s24, 0
      %p156 = por %p154, %p155
      %s158 = sadd.s32 %s157, 1
      %p161 = scmp.eq.s32.totalorder %s18, 1
      %p162 = scmp.ne.s32.totalorder %s157, %s159
      %p163 = scmp.eq.s32.totalorder %s18, 0
      %p164 = por %p162, %p163
      %p165 = scmp.ne.s32.totalorder %s157, %s159
      %p166 = scmp.eq.s32.totalorder %s23, 1
      %p167 = por %p165, %p166
      %p168 = scmp.ne.s32.totalorder %s159, %s160
      %p169 = scmp.eq.s32.totalorder %s23, 0
      %p170 = por %p168, %p169
      %p171 = scmp.ne.s32.totalorder %s159, %s160
      %p172 = scmp.eq.s32.totalorder %s24, 1
      %p173 = por %p171, %p172
      %p175 = scmp.ne.s32.totalorder %s160, %s174
      %p176 = scmp.eq.s32.totalorder %s24, 0
      %p177 = por %p175, %p176
      %s179 = sadd.s32 %s178, 1
      %p182 = scmp.eq.s32.totalorder %s18, 1
      %p183 = scmp.ne.s32.totalorder %s178, %s180
      %p184 = scmp.eq.s32.totalorder %s18, 0
      %p185 = por %p183, %p184
      %p186 = scmp.ne.s32.totalorder %s178, %s180
      %p187 = scmp.eq.s32.totalorder %s23, 1
      %p188 = por %p186, %p187
      %p189 = scmp.ne.s32.totalorder %s180, %s181
      %p190 = scmp.eq.s32.totalorder %s23, 0
      %p191 = por %p189, %p190
      %p192 = scmp.ne.s32.totalorder %s180, %s181
      %p193 = scmp.eq.s32.totalorder %s24, 1
      %p194 = por %p192, %p193
      %p196 = scmp.ne.s32.totalorder %s181, %s195
      %p197 = scmp.eq.s32.totalorder %s24, 0
      %p198 = por %p196, %p197
      %s200 = sadd.s32 %s199, 1
      %p203 = scmp.eq.s32.totalorder %s18, 1
      %p204 = scmp.ne.s32.totalorder %s199, %s201
      %p205 = scmp.eq.s32.totalorder %s18, 0
      %p206 = por %p204, %p205
      %p207 = scmp.ne.s32.totalorder %s199, %s201
      %p208 = scmp.eq.s32.totalorder %s23, 1
      %p209 = por %p207, %p208
      %p210 = scmp.ne.s32.totalorder %s201, %s202
      %p211 = scmp.eq.s32.totalorder %s23, 0
      %p212 = por %p210, %p211
      %p213 = scmp.ne.s32.totalorder %s201, %s202
      %p214 = scmp.eq.s32.totalorder %s24, 1
      %p215 = por %p213, %p214
      %p217 = scmp.ne.s32.totalorder %s202, %s216
      %p218 = scmp.eq.s32.totalorder %s24, 0
      %p219 = por %p217, %p218
      %s220 = ssub.s32 %s18, %s25
      %p221 = scmp.eq.s32.totalorder %s220, 0
      %s223 = sadd.s32 %s222, 1
      %s224 = scalar_select %p221, %s222, %s223
      %p227 = pneg %p221
      %p228 = scmp.eq.s32.totalorder %s18, 1
      %p229 = por %p227, %p228
      %p230 = scmp.ne.s32.totalorder %s222, %s225
      %p231 = scmp.eq.s32.totalorder %s18, 0
      %p232 = por %p230, %p231
      %p233 = scmp.ne.s32.totalorder %s222, %s225
      %p234 = scmp.eq.s32.totalorder %s23, 1
      %p235 = por %p233, %p234
      %p236 = scmp.ne.s32.totalorder %s225, %s226
      %p237 = scmp.eq.s32.totalorder %s23, 0
      %p238 = por %p236, %p237
      %p239 = scmp.ne.s32.totalorder %s225, %s226
      %p240 = scmp.eq.s32.totalorder %s24, 1
      %p241 = por %p239, %p240
      %p243 = scmp.ne.s32.totalorder %s226, %s242
      %p244 = scmp.eq.s32.totalorder %s24, 0
      %p245 = por %p243, %p244
      %p246 = scmp.le.s32.totalorder 1, %s18
      %p247 = scmp.lt.s32.totalorder %s18, 3
      %p248 = pnand %p246, %p247
      %p249 = pneg %p248
      // Predicated region
      $region9: #{tpu_custom_call.1} parent=5 // pred_check
        _
      $region10: #{tpu_custom_call.1} parent=5 // pred_check_branch
        %251 = sbr.rel (%p248) target = $region12
      $region11: #{tpu_custom_call.1} parent=5 // pred_region
        %s252 = ssub.s32 %s18, 1
        // Predicated region
        $region13: #{tpu_custom_call.1} parent=11 // pred_check
          %p253 = pneg %p65
        $region14: #{tpu_custom_call.1} parent=11 // pred_check_branch
          %255 = sbr.rel (%p253) target = $region16
        $region15: #{tpu_custom_call.1} parent=11 // pred_region
          _
        $region16: #{tpu_custom_call.1} parent=11 // pred_fallthru
          _
        // Predicated region
        $region17: #{tpu_custom_call.1} parent=11 // pred_check
          %p256 = pneg %p86
        $region18: #{tpu_custom_call.1} parent=11 // pred_check_branch
          %258 = sbr.rel (%p256) target = $region20
        $region19: #{tpu_custom_call.1} parent=11 // pred_region
          _
        $region20: #{tpu_custom_call.1} parent=11 // pred_fallthru
          _
        // Predicated region
        $region21: #{tpu_custom_call.1} parent=11 // pred_check
          %p259 = pneg %p107
        $region22: #{tpu_custom_call.1} parent=11 // pred_check_branch
          %261 = sbr.rel (%p259) target = $region24
        $region23: #{tpu_custom_call.1} parent=11 // pred_region
          _
        $region24: #{tpu_custom_call.1} parent=11 // pred_fallthru
          _
        // Predicated region
        $region25: #{tpu_custom_call.1} parent=11 // pred_check
          %p262 = pneg %p128
        $region26: #{tpu_custom_call.1} parent=11 // pred_check_branch
          %264 = sbr.rel (%p262) target = $region28
        $region27: #{tpu_custom_call.1} parent=11 // pred_region
          _
        $region28: #{tpu_custom_call.1} parent=11 // pred_fallthru
          _
        // Predicated region
        $region29: #{tpu_custom_call.1} parent=11 // pred_check
          %p265 = pneg %p149
        $region30: #{tpu_custom_call.1} parent=11 // pred_check_branch
          %267 = sbr.rel (%p265) target = $region32
        $region31: #{tpu_custom_call.1} parent=11 // pred_region
          _
        $region32: #{tpu_custom_call.1} parent=11 // pred_fallthru
          _
        // Predicated region
        $region33: #{tpu_custom_call.1} parent=11 // pred_check
          %p268 = pneg %p170
        $region34: #{tpu_custom_call.1} parent=11 // pred_check_branch
          %270 = sbr.rel (%p268) target = $region36
        $region35: #{tpu_custom_call.1} parent=11 // pred_region
          _
        $region36: #{tpu_custom_call.1} parent=11 // pred_fallthru
          _
        // Predicated region
        $region37: #{tpu_custom_call.1} parent=11 // pred_check
          %p271 = pneg %p191
        $region38: #{tpu_custom_call.1} parent=11 // pred_check_branch
          %273 = sbr.rel (%p271) target = $region40
        $region39: #{tpu_custom_call.1} parent=11 // pred_region
          _
        $region40: #{tpu_custom_call.1} parent=11 // pred_fallthru
          _
        // Predicated region
        $region41: #{tpu_custom_call.1} parent=11 // pred_check
          %p274 = pneg %p212
        $region42: #{tpu_custom_call.1} parent=11 // pred_check_branch
          %276 = sbr.rel (%p274) target = $region44
        $region43: #{tpu_custom_call.1} parent=11 // pred_region
          _
        $region44: #{tpu_custom_call.1} parent=11 // pred_fallthru
          _
      $region12: #{tpu_custom_call.1} parent=5 // pred_fallthru
        _
      %p277 = scmp.lt.s32.totalorder %s18, 2
      // Predicated region
      $region45: #{tpu_custom_call.1} parent=5 // pred_check
        %p278 = pneg %p277
      $region46: #{tpu_custom_call.1} parent=5 // pred_check_branch
        %280 = sbr.rel (%p278) target = $region48
      $region47: #{tpu_custom_call.1} parent=5 // pred_region
        // Predicated region
        $region49: #{tpu_custom_call.1} parent=47 // pred_check
          %p281 = pneg %p38
        $region50: #{tpu_custom_call.1} parent=47 // pred_check_branch
          %283 = sbr.rel (%p281) target = $region52
        $region51: #{tpu_custom_call.1} parent=47 // pred_region
          %p284 = scmp.lt.s32.totalorder %s18, 1
          %s285 = scalar_select %p284, %s18, 1
          %s286 = smul.addr %s285, 2
          %s287 = smul.addr %s286, 4
          %s288 = scalar_lea.vmem %s0, %s287
        $region52: #{tpu_custom_call.1} parent=47 // pred_fallthru
          _
      $region48: #{tpu_custom_call.1} parent=5 // pred_fallthru
        _
      %p289 = scmp.le.s32.totalorder 1, %s18
      %p290 = scmp.lt.s32.totalorder %s18, 3
      %p291 = pnand %p289, %p290
      %p292 = pneg %p291
      // Predicated region
      $region53: #{tpu_custom_call.1} parent=5 // pred_check
        _
      $region54: #{tpu_custom_call.1} parent=5 // pred_check_branch
        %294 = sbr.rel (%p291) target = $region56
      $region55: #{tpu_custom_call.1} parent=5 // pred_region
        %s295 = ssub.s32 %s18, 1
        %p296 = scmp.lt.s32.totalorder %s23, 1
        %s297 = scalar_select %p296, %s23, 1
        %s298 = smul.addr %s297, 2
        %s299 = smul.addr %s298, 4
        %s300 = scalar_lea.vmem %s0, %s299
        %p301 = pneg %p44
        %p302 = pneg %p41
        %p303 = pneg %p65
        %p304 = pneg %p62
        %p305 = pneg %p86
        %p306 = pneg %p83
        %p307 = pneg %p107
        %p308 = pneg %p104
        %p309 = pneg %p128
        %p310 = pneg %p125
        %p311 = pneg %p149
        %p312 = pneg %p146
        %p313 = pneg %p170
        %p314 = pneg %p167
        %p315 = pneg %p191
        %p316 = pneg %p188
        %p317 = pneg %p212
        %p318 = pneg %p209
        %p319 = pneg %p238
        %p320 = pneg %p235
        %s321 = sand.u32 %s225, 1
        %s322 = scalar_lea.sflag [#allocation3], %s321
        %s323 = sand.u32 %s225, 1
        %s324 = smul.addr %s323, 64
        %s325 = scalar_lea.vmem [#allocation2], %s324
        %p326 = scmp.lt.s32.totalorder %s23, 1
        %s327 = scalar_select %p326, %s23, 1
        %s328 = smul.addr %s327, 2
        %s329 = smul.addr %s328, 4
        %s330 = scalar_lea.vmem %s0, %s329
        %v331 = vld [vmem:[%s330] sm:$0xff]
        %v332 = vld [vmem:[%s1] sm:$0xff]
        %v333 = vld [vmem:[%s2] sm:$0xff]
        %335 = vset.pattern.permute.xlu0 0
        %336 = vperm.xlu0 %335, %v333
        %v337 = vpop.permute.xlu0 %336
        %v340 = vcombine.high %v331, %v331
        %vm341 = vcmask 31744
        %v343 = vsel %vm341, %v332, 0
        %vm345 = vcmask 1043456
        %v346 = vsel %vm345, %v331, 0
        %v348 = vsel %vm345, %v340, 0
        %350 = vmatprep.subr.mxu0 0.0
        %351 = vmatpush1.msra.mxu0 0.0
        %352 = vmatprep.subr.mxu0 0.0
        %353 = vmatpush1.msra.mxu0 0.0
        %354 = vmatprep.subr.mxu0 0.0
        %355 = vmatpush1.msra.mxu0 0.0
        %356 = vmatprep.subr.mxu0 0.0
        %357 = vmatpush1.msra.mxu0 0.0
        %358 = vmatprep.subr.mxu0 0.0
        %359 = vmatpush1.msra.mxu0 0.0
        %360 = vmatprep.subr.mxu0 0.0
        %361 = vmatpush1.msra.mxu0 0.0
        %362 = vmatprep.subr.mxu0 0.0
        %363 = vmatpush1.msra.mxu0 0.0
        %364 = vmatprep.subr.mxu0 0.0
        %365 = vmatpush1.msra.mxu0 0.0
        %366 = vmatprep.subr.mxu0 0.0
        %367 = vmatpush1.msra.mxu0 0.0
        %368 = vmatprep.subr.mxu0 0.0
        %369 = vmatpush1.msra.mxu0 0.0
        %370 = vmatprep.subr.mxu0 0.0
        %371 = vmatpush1.msra.mxu0 0.0
        %372 = vmatprep.subr.mxu0 0.0
        %373 = vmatpush1.msra.mxu0 0.0
        %374 = vmatprep.subr.mxu0 0.0
        %375 = vmatpush1.msra.mxu0 0.0
        %376 = vmatprep.subr.mxu0 0.0
        %377 = vmatpush1.msra.mxu0 0.0
        %378 = vmatprep.subr.mxu0 0.0
        %379 = vmatpush1.msra.mxu0 0.0
        %380 = vmatprep.subr.mxu0 %v348
        %381 = vmatpush1.msra.mxu0 %v346
        %382 = vmatprep.subr.mxu0 0.0
        %383 = vmatpush2.msra.mxu0 0.0
        %384 = vmatprep.subr.mxu0 0.0
        %385 = vmatpush2.msra.mxu0 0.0
        %386 = vmatprep.subr.mxu0 0.0
        %387 = vmatpush2.msra.mxu0 0.0
        %388 = vmatprep.subr.mxu0 0.0
        %389 = vmatpush2.msra.mxu0 0.0
        %390 = vmatprep.subr.mxu0 0.0
        %391 = vmatpush2.msra.mxu0 0.0
        %392 = vmatprep.subr.mxu0 0.0
        %393 = vmatpush2.msra.mxu0 0.0
        %394 = vmatprep.subr.mxu0 0.0
        %395 = vmatpush2.msra.mxu0 0.0
        %396 = vmatprep.subr.mxu0 0.0
        %397 = vmatpush2.msra.mxu0 0.0
        %398 = vmatprep.subr.mxu0 0.0
        %399 = vmatpush2.msra.mxu0 0.0
        %400 = vmatprep.subr.mxu0 0.0
        %401 = vmatpush2.msra.mxu0 0.0
        %402 = vmatprep.subr.mxu0 0.0
        %403 = vmatpush2.msra.mxu0 0.0
        %404 = vmatprep.subr.mxu0 0.0
        %405 = vmatpush2.msra.mxu0 0.0
        %406 = vmatprep.subr.mxu0 0.0
        %407 = vmatpush2.msra.mxu0 0.0
        %408 = vmatprep.subr.mxu0 0.0
        %409 = vmatpush2.msra.mxu0 0.0
        %410 = vmatprep.subr.mxu0 0.0
        %411 = vmatpush2.msra.mxu0 0.0
        %412 = vmatprep.subr.mxu0 0.0
        %413 = vmatpush2.msra.mxu0 0.0
        %414 = vmatprep.mubr.f32.mxu0 0.0
        %415 = vmatmul.mubr.f32.gmra.mxu0 %v343
        %v416 = vpop.f32.mrf.mxu0
        %v417 = vadd.f32 %v337, %v416
        %v418 = vpop.f32.mrf.mxu0
        %v419 = vadd.f32 %v337, %v418
        %420 = vdwg.mxu0
        %v421 = vmax.f32 %v417, 0.0
        %v422 = vmax.f32 %v419, 0.0
        %v423 = vlaneseq
        %v424 = vand.u32 %v423, 127
        %v425 = vadd.s32 %v424, 128
        %vm426 = vcmp.lt.s32.totalorder %v424, 0
        %v427 = vsub.s32 0, %v424
        %v428 = vsel %vm426, %v427, %v424
        %v429 = vshrl.u32 %v428, 4
        %v430 = vand.u32 %v428, 15
        %v431 = vsub.s32 0, %v430
        %v432 = vsel %vm426, %v431, %v430
        %vm433 = vcmp.lt.s32.totalorder %v425, 0
        %v434 = vsub.s32 0, %v425
        %v435 = vsel %vm433, %v434, %v425
        %v436 = vshrl.u32 %v435, 4
        %v437 = vand.u32 %v435, 15
        %v438 = vsub.s32 0, %v437
        %v439 = vsel %vm433, %v438, %v437
        %vm440 = vcmp.ne.s32.totalorder %v432, 0
        %vm441 = vcmp.ne.s32.totalorder %v439, 0
        %vm442 = vcmp.lt.s32.totalorder %v432, 0
        %vm443 = vcmp.lt.s32.totalorder %v439, 0
        %vm444 = vmand %vm442, %vm440
        %vm445 = vmand %vm443, %vm441
        %v446 = vadd.s32 %v432, 16
        %v447 = vadd.s32 %v439, 16
        %v448 = vsel %vm444, %v446, %v432
        %v449 = vsel %vm445, %v447, %v439
        %vm450 = vcmp.ge.s32.totalorder %v424, 16
        %vm451 = vcmp.ge.s32.totalorder %v425, 16
        %452 = vrot.lane.b32.xlu0 %v421, 16
        %v453 = vpop.permute.xlu0 %452
        %454 = vrot.lane.b32.xlu0 %v422, 16
        %v455 = vpop.permute.xlu0 %454
        %vm456 = vcmp.lt.s32.totalorder %v424, 16
        %v457 = vsel %vm456, %v453, %v455
        %v458 = vsel %vm456, %v455, %v453
        %v459 = vsel %vm450, %v458, 0.0
        %v460 = vsel %vm451, %v457, 0.0
        %vm461 = vcmp.lt.s32.totalorder %v424, 240
        %vm462 = vcmp.lt.s32.totalorder %v425, 240
        %463 = vrot.lane.b32.xlu0 %v421, 112
        %v464 = vpop.permute.xlu0 %463
        %465 = vrot.lane.b32.xlu0 %v422, 112
        %v466 = vpop.permute.xlu0 %465
        %vm467 = vcmp.lt.s32.totalorder %v424, 112
        %v468 = vsel %vm467, %v464, %v466
        %v469 = vsel %vm467, %v466, %v464
        %v470 = vsel %vm461, %v468, 0.0
        %v471 = vsel %vm462, %v469, 0.0
        %v472 = vld [vmem:[%s3] sm:$0xff]
        %v473 = vld [vmem:[%s4] sm:$0xff]
        %475 = vset.pattern.permute.xlu0 0
        %476 = vperm.xlu0 %475, %v473
        %v477 = vpop.permute.xlu0 %476
        %vm479 = vcmask 195584
        %v481 = vsel %vm479, %v472, 0
        %483 = vmatprep.subr.mxu0 0.0
        %484 = vmatpush1.msra.mxu0 0.0
        %485 = vmatprep.subr.mxu0 0.0
        %486 = vmatpush1.msra.mxu0 0.0
        %487 = vmatprep.subr.mxu0 0.0
        %488 = vmatpush1.msra.mxu0 0.0
        %489 = vmatprep.subr.mxu0 0.0
        %490 = vmatpush1.msra.mxu0 0.0
        %491 = vmatprep.subr.mxu0 0.0
        %492 = vmatpush1.msra.mxu0 0.0
        %493 = vmatprep.subr.mxu0 0.0
        %494 = vmatpush1.msra.mxu0 0.0
        %495 = vmatprep.subr.mxu0 0.0
        %496 = vmatpush1.msra.mxu0 0.0
        %497 = vmatprep.subr.mxu0 0.0
        %498 = vmatpush1.msra.mxu0 0.0
        %499 = vmatprep.subr.mxu0 0.0
        %500 = vmatpush1.msra.mxu0 0.0
        %501 = vmatprep.subr.mxu0 0.0
        %502 = vmatpush1.msra.mxu0 0.0
        %503 = vmatprep.subr.mxu0 0.0
        %504 = vmatpush1.msra.mxu0 0.0
        %505 = vmatprep.subr.mxu0 0.0
        %506 = vmatpush1.msra.mxu0 0.0
        %507 = vmatprep.subr.mxu0 0.0
        %508 = vmatpush1.msra.mxu0 0.0
        %509 = vmatprep.subr.mxu0 %v471
        %510 = vmatpush1.msra.mxu0 %v470
        %511 = vmatprep.subr.mxu0 %v422
        %512 = vmatpush1.msra.mxu0 %v421
        %513 = vmatprep.subr.mxu0 %v460
        %514 = vmatpush1.msra.mxu0 %v459
        %515 = vmatprep.subr.mxu0 0.0
        %516 = vmatpush2.msra.mxu0 0.0
        %517 = vmatprep.subr.mxu0 0.0
        %518 = vmatpush2.msra.mxu0 0.0
        %519 = vmatprep.subr.mxu0 0.0
        %520 = vmatpush2.msra.mxu0 0.0
        %521 = vmatprep.subr.mxu0 0.0
        %522 = vmatpush2.msra.mxu0 0.0
        %523 = vmatprep.subr.mxu0 0.0
        %524 = vmatpush2.msra.mxu0 0.0
        %525 = vmatprep.subr.mxu0 0.0
        %526 = vmatpush2.msra.mxu0 0.0
        %527 = vmatprep.subr.mxu0 0.0
        %528 = vmatpush2.msra.mxu0 0.0
        %529 = vmatprep.subr.mxu0 0.0
        %530 = vmatpush2.msra.mxu0 0.0
        %531 = vmatprep.subr.mxu0 0.0
        %532 = vmatpush2.msra.mxu0 0.0
        %533 = vmatprep.subr.mxu0 0.0
        %534 = vmatpush2.msra.mxu0 0.0
        %535 = vmatprep.subr.mxu0 0.0
        %536 = vmatpush2.msra.mxu0 0.0
        %537 = vmatprep.subr.mxu0 0.0
        %538 = vmatpush2.msra.mxu0 0.0
        %539 = vmatprep.subr.mxu0 0.0
        %540 = vmatpush2.msra.mxu0 0.0
        %541 = vmatprep.subr.mxu0 0.0
        %542 = vmatpush2.msra.mxu0 0.0
        %543 = vmatprep.subr.mxu0 0.0
        %544 = vmatpush2.msra.mxu0 0.0
        %545 = vmatprep.subr.mxu0 0.0
        %546 = vmatpush2.msra.mxu0 0.0
        %547 = vmatprep.mubr.f32.mxu0 0.0
        %548 = vmatmul.mubr.f32.gmra.mxu0 %v481
        %v549 = vpop.f32.mrf.mxu0
        %v550 = vadd.f32 %v477, %v549
        %v551 = vpop.f32.mrf.mxu0
        %v552 = vadd.f32 %v477, %v551
        %553 = vdwg.mxu0
        %v554 = vmax.f32 %v550, 0.0
        %v555 = vmax.f32 %v552, 0.0
        %vm556 = vcmp.ge.s32.totalorder %v448, 1
        %vm557 = vcmp.ge.s32.totalorder %v449, 1
        %558 = vrot.lane.b32.xlu0 %v554, 1
        %v559 = vpop.permute.xlu0 %558
        %560 = vrot.lane.b32.xlu0 %v555, 1
        %v561 = vpop.permute.xlu0 %560
        %vm562 = vcmp.lt.s32.totalorder %v424, 1
        %v563 = vsel %vm562, %v559, %v561
        %v564 = vsel %vm562, %v561, %v559
        %v565 = vsel %vm556, %v564, 0.0
        %v566 = vsel %vm557, %v563, 0.0
        %vm567 = vcmp.le.s32.totalorder %v448, 14
        %vm568 = vcmp.le.s32.totalorder %v449, 14
        %569 = vrot.lane.b32.xlu0 %v554, 127
        %v570 = vpop.permute.xlu0 %569
        %571 = vrot.lane.b32.xlu0 %v555, 127
        %v572 = vpop.permute.xlu0 %571
        %vm573 = vcmp.lt.s32.totalorder %v424, 127
        %v574 = vsel %vm573, %v570, %v572
        %v575 = vsel %vm573, %v572, %v570
        %v576 = vsel %vm567, %v574, 0.0
        %v577 = vsel %vm568, %v575, 0.0
        %v578 = vld [vmem:[%s5] sm:$0xff]
        %v579 = vld [vmem:[%s6] sm:$0xff]
        %581 = vset.pattern.permute.xlu0 0
        %582 = vperm.xlu0 %581, %v579
        %v583 = vpop.permute.xlu0 %582
        %v586 = vsel %vm479, %v578, 0
        %588 = vmatprep.subr.mxu0 0.0
        %589 = vmatpush1.msra.mxu0 0.0
        %590 = vmatprep.subr.mxu0 0.0
        %591 = vmatpush1.msra.mxu0 0.0
        %592 = vmatprep.subr.mxu0 0.0
        %593 = vmatpush1.msra.mxu0 0.0
        %594 = vmatprep.subr.mxu0 0.0
        %595 = vmatpush1.msra.mxu0 0.0
        %596 = vmatprep.subr.mxu0 0.0
        %597 = vmatpush1.msra.mxu0 0.0
        %598 = vmatprep.subr.mxu0 0.0
        %599 = vmatpush1.msra.mxu0 0.0
        %600 = vmatprep.subr.mxu0 0.0
        %601 = vmatpush1.msra.mxu0 0.0
        %602 = vmatprep.subr.mxu0 0.0
        %603 = vmatpush1.msra.mxu0 0.0
        %604 = vmatprep.subr.mxu0 0.0
        %605 = vmatpush1.msra.mxu0 0.0
        %606 = vmatprep.subr.mxu0 0.0
        %607 = vmatpush1.msra.mxu0 0.0
        %608 = vmatprep.subr.mxu0 0.0
        %609 = vmatpush1.msra.mxu0 0.0
        %610 = vmatprep.subr.mxu0 0.0
        %611 = vmatpush1.msra.mxu0 0.0
        %612 = vmatprep.subr.mxu0 0.0
        %613 = vmatpush1.msra.mxu0 0.0
        %614 = vmatprep.subr.mxu0 %v577
        %615 = vmatpush1.msra.mxu0 %v576
        %616 = vmatprep.subr.mxu0 %v555
        %617 = vmatpush1.msra.mxu0 %v554
        %618 = vmatprep.subr.mxu0 %v566
        %619 = vmatpush1.msra.mxu0 %v565
        %620 = vmatprep.subr.mxu0 0.0
        %621 = vmatpush2.msra.mxu0 0.0
        %622 = vmatprep.subr.mxu0 0.0
        %623 = vmatpush2.msra.mxu0 0.0
        %624 = vmatprep.subr.mxu0 0.0
        %625 = vmatpush2.msra.mxu0 0.0
        %626 = vmatprep.subr.mxu0 0.0
        %627 = vmatpush2.msra.mxu0 0.0
        %628 = vmatprep.subr.mxu0 0.0
        %629 = vmatpush2.msra.mxu0 0.0
        %630 = vmatprep.subr.mxu0 0.0
        %631 = vmatpush2.msra.mxu0 0.0
        %632 = vmatprep.subr.mxu0 0.0
        %633 = vmatpush2.msra.mxu0 0.0
        %634 = vmatprep.subr.mxu0 0.0
        %635 = vmatpush2.msra.mxu0 0.0
        %636 = vmatprep.subr.mxu0 0.0
        %637 = vmatpush2.msra.mxu0 0.0
        %638 = vmatprep.subr.mxu0 0.0
        %639 = vmatpush2.msra.mxu0 0.0
        %640 = vmatprep.subr.mxu0 0.0
        %641 = vmatpush2.msra.mxu0 0.0
        %642 = vmatprep.subr.mxu0 0.0
        %643 = vmatpush2.msra.mxu0 0.0
        %644 = vmatprep.subr.mxu0 0.0
        %645 = vmatpush2.msra.mxu0 0.0
        %646 = vmatprep.subr.mxu0 0.0
        %647 = vmatpush2.msra.mxu0 0.0
        %648 = vmatprep.subr.mxu0 0.0
        %649 = vmatpush2.msra.mxu0 0.0
        %650 = vmatprep.subr.mxu0 0.0
        %651 = vmatpush2.msra.mxu0 0.0
        %652 = vmatprep.mubr.f32.mxu0 0.0
        %653 = vmatmul.mubr.f32.gmra.mxu0 %v586
        %v654 = vpop.f32.mrf.mxu0
        %v655 = vadd.f32 %v583, %v654
        %v656 = vpop.f32.mrf.mxu0
        %v657 = vadd.f32 %v583, %v656
        %658 = vdwg.mxu0
        %v659 = vmax.f32 %v655, 0.0
        %v660 = vmax.f32 %v657, 0.0
        %v661 = vld [vmem:[%s7] sm:$0xff]
        %v662 = vld [vmem:[%s7 + $0x8] sm:$0xff]
        %v663 = vld [vmem:[%s7 + $0x10] sm:$0xff]
        %v664 = vld [vmem:[%s7 + $0x18] sm:$0xff]
        %v665 = vld [vmem:[%s8] sm:$0xff]
        %v666 = vld [vmem:[%s8 + $0x8] sm:$0xff]
        %v667 = vld [vmem:[%s8 + $0x10] sm:$0xff]
        %v668 = vld [vmem:[%s8 + $0x18] sm:$0xff]
        %670 = vset.pattern.permute.xlu0 0
        %671 = vperm.xlu0 %670, %v665
        %v672 = vpop.permute.xlu0 %671
        %675 = vset.pattern.permute.xlu0 0
        %676 = vperm.xlu0 %675, %v666
        %v677 = vpop.permute.xlu0 %676
        %680 = vset.pattern.permute.xlu0 0
        %681 = vperm.xlu0 %680, %v667
        %v682 = vpop.permute.xlu0 %681
        %685 = vset.pattern.permute.xlu0 0
        %686 = vperm.xlu0 %685, %v668
        %v687 = vpop.permute.xlu0 %686
        %vm689 = vcmask 64512
        %v691 = vsel %vm689, %v661, 0
        %v694 = vsel %vm689, %v662, 0
        %v697 = vsel %vm689, %v663, 0
        %v700 = vsel %vm689, %v664, 0
        %702 = vmatprep.subr.mxu0 0.0
        %703 = vmatpush1.msra.mxu0 0.0
        %704 = vmatprep.subr.mxu0 0.0
        %705 = vmatpush1.msra.mxu0 0.0
        %706 = vmatprep.subr.mxu0 0.0
        %707 = vmatpush1.msra.mxu0 0.0
        %708 = vmatprep.subr.mxu0 0.0
        %709 = vmatpush1.msra.mxu0 0.0
        %710 = vmatprep.subr.mxu0 0.0
        %711 = vmatpush1.msra.mxu0 0.0
        %712 = vmatprep.subr.mxu0 0.0
        %713 = vmatpush1.msra.mxu0 0.0
        %714 = vmatprep.subr.mxu0 0.0
        %715 = vmatpush1.msra.mxu0 0.0
        %716 = vmatprep.subr.mxu0 0.0
        %717 = vmatpush1.msra.mxu0 0.0
        %718 = vmatprep.subr.mxu0 0.0
        %719 = vmatpush1.msra.mxu0 0.0
        %720 = vmatprep.subr.mxu0 0.0
        %721 = vmatpush1.msra.mxu0 0.0
        %722 = vmatprep.subr.mxu0 0.0
        %723 = vmatpush1.msra.mxu0 0.0
        %724 = vmatprep.subr.mxu0 0.0
        %725 = vmatpush1.msra.mxu0 0.0
        %726 = vmatprep.subr.mxu0 0.0
        %727 = vmatpush1.msra.mxu0 0.0
        %728 = vmatprep.subr.mxu0 0.0
        %729 = vmatpush1.msra.mxu0 0.0
        %730 = vmatprep.subr.mxu0 0.0
        %731 = vmatpush1.msra.mxu0 0.0
        %732 = vmatprep.subr.mxu0 %v660
        %733 = vmatpush1.msra.mxu0 %v659
        %734 = vmatprep.subr.mxu0 0.0
        %735 = vmatpush2.msra.mxu0 0.0
        %736 = vmatprep.subr.mxu0 0.0
        %737 = vmatpush2.msra.mxu0 0.0
        %738 = vmatprep.subr.mxu0 0.0
        %739 = vmatpush2.msra.mxu0 0.0
        %740 = vmatprep.subr.mxu0 0.0
        %741 = vmatpush2.msra.mxu0 0.0
        %742 = vmatprep.subr.mxu0 0.0
        %743 = vmatpush2.msra.mxu0 0.0
        %744 = vmatprep.subr.mxu0 0.0
        %745 = vmatpush2.msra.mxu0 0.0
        %746 = vmatprep.subr.mxu0 0.0
        %747 = vmatpush2.msra.mxu0 0.0
        %748 = vmatprep.subr.mxu0 0.0
        %749 = vmatpush2.msra.mxu0 0.0
        %750 = vmatprep.subr.mxu0 0.0
        %751 = vmatpush2.msra.mxu0 0.0
        %752 = vmatprep.subr.mxu0 0.0
        %753 = vmatpush2.msra.mxu0 0.0
        %754 = vmatprep.subr.mxu0 0.0
        %755 = vmatpush2.msra.mxu0 0.0
        %756 = vmatprep.subr.mxu0 0.0
        %757 = vmatpush2.msra.mxu0 0.0
        %758 = vmatprep.subr.mxu0 0.0
        %759 = vmatpush2.msra.mxu0 0.0
        %760 = vmatprep.subr.mxu0 0.0
        %761 = vmatpush2.msra.mxu0 0.0
        %762 = vmatprep.subr.mxu0 0.0
        %763 = vmatpush2.msra.mxu0 0.0
        %764 = vmatprep.subr.mxu0 0.0
        %765 = vmatpush2.msra.mxu0 0.0
        %766 = vmatprep.mubr.f32.mxu0 0.0
        %767 = vmatmul.mubr.f32.gmra.mxu0 %v691
        %v768 = vpop.f32.mrf.mxu0
        %v769 = vadd.f32 %v672, %v768
        %v770 = vpop.f32.mrf.mxu0
        %v771 = vadd.f32 %v672, %v770
        %772 = vmatprep.mubr.f32.mxu0 0.0
        %773 = vmatmul.mubr.f32.gmra.mxu0 %v694
        %v774 = vpop.f32.mrf.mxu0
        %v775 = vadd.f32 %v677, %v774
        %v776 = vpop.f32.mrf.mxu0
        %v777 = vadd.f32 %v677, %v776
        %778 = vmatprep.mubr.f32.mxu0 0.0
        %779 = vmatmul.mubr.f32.gmra.mxu0 %v697
        %v780 = vpop.f32.mrf.mxu0
        %v781 = vadd.f32 %v682, %v780
        %v782 = vpop.f32.mrf.mxu0
        %v783 = vadd.f32 %v682, %v782
        %784 = vmatprep.mubr.f32.mxu0 0.0
        %785 = vmatmul.mubr.f32.gmra.mxu0 %v700
        %v786 = vpop.f32.mrf.mxu0
        %v787 = vadd.f32 %v687, %v786
        %v788 = vpop.f32.mrf.mxu0
        %v789 = vadd.f32 %v687, %v788
        %790 = vdwg.mxu0
        %791 = vst [vmem:[%s325] sm:$0xff] %v769
        %792 = vst [vmem:[%s325 + $0x8] sm:$0xff] %v771
        %793 = vst [vmem:[%s325 + $0x10] sm:$0xff] %v775
        %794 = vst [vmem:[%s325 + $0x18] sm:$0xff] %v777
        %795 = vst [vmem:[%s325 + $0x20] sm:$0xff] %v781
        %796 = vst [vmem:[%s325 + $0x28] sm:$0xff] %v783
        %797 = vst [vmem:[%s325 + $0x30] sm:$0xff] %v787
        %798 = vst [vmem:[%s325 + $0x38] sm:$0xff] %v789
        %s799 = sand.u32 %s225, 1
        %s800 = scalar_lea.sflag [#allocation3], %s799
        %s801 = sand.u32 %s225, 1
        %s802 = smul.addr %s801, 64
        %s803 = scalar_lea.vmem [#allocation2], %s802
        // Predicated region
        $region57: #{tpu_custom_call.1} parent=55 // pred_check
          %p804 = pneg %p235
        $region58: #{tpu_custom_call.1} parent=55 // pred_check_branch
          %806 = sbr.rel (%p804) target = $region60
        $region59: #{tpu_custom_call.1} parent=55 // pred_region
          %s808 = ssub.s32 1024, 1024
          %809 = vsyncadd %s800, %s808
          %s810 = smul.addr %s23, 8
          %s811 = smul.addr %s810, 128
          %s812 = scalar_lea.hbm %s9, %s811
          %s813 = sshll.u32 %s803, 4
          %s814 = int_to_ptr.vmem [resolvable:$true] %s813
          %819 = dma.vmem_to_hbm [thread:$0]  %s814, 1024, %s812, %s800, 256, 256, 16
        $region60: #{tpu_custom_call.1} parent=55 // pred_fallthru
          _
      $region56: #{tpu_custom_call.1} parent=5 // pred_fallthru
        _
      %p820 = scmp.le.s32.totalorder 2, %s18
      // Predicated region
      $region61: #{tpu_custom_call.1} parent=5 // pred_check
        %p821 = pneg %p820
      $region62: #{tpu_custom_call.1} parent=5 // pred_check_branch
        %823 = sbr.rel (%p821) target = $region64
      $region63: #{tpu_custom_call.1} parent=5 // pred_region
        %s824 = ssub.s32 %s18, 2
        // Predicated region
        $region65: #{tpu_custom_call.1} parent=63 // pred_check
          %p825 = pneg %p241
        $region66: #{tpu_custom_call.1} parent=63 // pred_check_branch
          %827 = sbr.rel (%p825) target = $region68
        $region67: #{tpu_custom_call.1} parent=63 // pred_region
          %s828 = sand.u32 %s226, 1
          %s829 = scalar_lea.sflag [#allocation3], %s828
          %s830 = sand.u32 %s226, 1
          %s831 = smul.addr %s830, 64
          %s832 = scalar_lea.vmem [#allocation2], %s831
          %833 = dma.done %s829, 1024
        $region68: #{tpu_custom_call.1} parent=63 // pred_fallthru
          _
      $region64: #{tpu_custom_call.1} parent=5 // pred_fallthru
        _
    $region6: #{tpu_custom_call.1} parent=1 // loop_footer
      %s22 = sadd.s32 1, %s18
    $region7: #{tpu_custom_call.1} parent=1 // loop_footer_branch
      %17 = sbr.rel target = $region3
    $region8: #{tpu_custom_call.1} parent=1 // loop_exit
      _
    %834 = vsyncpa [#allocation3], 1
    %s835 = scalar_lea.sflag [#allocation3], 1
    %836 = vsyncpa %s835, 1

</llo_original>
